<compile_context>
chip_gen: v7x
topology: tpu7x:2x2x1
jax: 0.10.0
libtpu: 0.0.40
codegen_flags: <defaults>
</compile_context>

<pallas_src>
import functools
import numpy as np
import jax
import jax.numpy as jnp
from jax.experimental import pallas as pl
from jax.experimental.pallas import tpu as pltpu


_MAX_ROW_TILE = 4096  # multiple of 8; ~8 MiB double-buffered VMEM after lane padding


def _round_up(n, m):
    return -(-n // m) * m


def _harmonic_kernel(x_ref, f_ref, o_ref, *, C, H, include_input):
    # x_ref: (tm, C) f32    f_ref: (1, H) f32    o_ref: (tm, out_dim) f32
    x = x_ref[...]
    f = f_ref[...]                                   # (1, H)
    CH = C * H
    # embed[:, c*H + h] = x[:, c] * freq[h]  -- VPU broadcast multiplies (exact f32).
    embed = jnp.concatenate([x[:, c:c + 1] * f for c in range(C)], axis=-1)  # (tm, CH)
    # Direct slice stores (no (tm, out_dim) concat temporary).
    o_ref[:, :CH] = jnp.sin(embed)
    o_ref[:, CH:2 * CH] = jnp.cos(embed)
    if include_input:
        o_ref[:, 2 * CH:] = x


def make_harmonic_embedding(in_channels=3, n_harmonic_functions=6, omega0=1.0,
                            logspace=True, include_input=True):
    C, H = in_channels, n_harmonic_functions
    if logspace:
        frequencies = 2.0 ** np.arange(H, dtype=np.float32)
    else:
        frequencies = np.linspace(1.0, 2.0 ** (H - 1), H, dtype=np.float32)
    frequencies = (np.float32(omega0) * frequencies).astype(np.float32)
    freqs_row = jnp.asarray(frequencies).reshape(1, H)

    out_dim = 2 * C * H + (C if include_input else 0)
    kernel = functools.partial(_harmonic_kernel, C=C, H=H,
                               include_input=include_input)

    def forward(x):
        assert x.shape[-1] == C, x.shape
        lead = x.shape[:-1]
        n = int(np.prod(lead)) if lead else 1
        x2 = x.reshape(n, C).astype(jnp.float32)

        # Largest row tile (multiple of 8, capped); the partial last block is
        # handled by Pallas (masked writeback), so no wrapper pad or slice.
        tm = min(_MAX_ROW_TILE, _round_up(max(n, 1), 8))
        grid = (pl.cdiv(n, tm),)

        out = pl.pallas_call(
            kernel,
            out_shape=jax.ShapeDtypeStruct((n, out_dim), jnp.float32),
            grid_spec=pltpu.PrefetchScalarGridSpec(
                num_scalar_prefetch=0,
                grid=grid,
                in_specs=[
                    pl.BlockSpec((tm, C), lambda i: (i, 0)),
                    pl.BlockSpec((1, H), lambda i: (0, 0)),
                ],
                out_specs=pl.BlockSpec((tm, out_dim), lambda i: (i, 0)),
            ),
            compiler_params=pltpu.CompilerParams(
                dimension_semantics=("parallel",)),
        )(x2, freqs_row)

        return out.reshape(*lead, out_dim)

    return forward, frequencies, out_dim


if __name__ == "__main__":
    def ref_forward(x, freqs, include_input):
        embed = (x[..., None] * jnp.asarray(freqs)).reshape(*x.shape[:-1], -1)
        parts = [jnp.sin(embed), jnp.cos(embed)]
        if include_input:
            parts.append(x)
        return jnp.concatenate(parts, axis=-1)

    C, H = 3, 6
    B, S = 2, 8
    key = jax.random.PRNGKey(0)
    k0, k1 = jax.random.split(key)

    # Case 1: default module config, (B, S, C) input.
    x = jax.random.normal(k0, (B, S, C), dtype=jnp.float32)
    fwd, freqs, out_dim = make_harmonic_embedding(
        in_channels=C, n_harmonic_functions=H, omega0=1.0,
        logspace=True, include_input=True)
    y = fwd(x)
    jax.block_until_ready(y)
    assert y.shape == (B, S, out_dim), (y.shape, out_dim)
    np.testing.assert_allclose(np.asarray(y),
                               np.asarray(ref_forward(x, freqs, True)),
                               atol=1e-5, rtol=1e-5)

    # Case 2: row count not a multiple of 8 (exercises the masked tail block).
    x_tail = jax.random.normal(k1, (5, C), dtype=jnp.float32)
    y_tail = fwd(x_tail)
    jax.block_until_ready(y_tail)
    np.testing.assert_allclose(np.asarray(y_tail),
                               np.asarray(ref_forward(x_tail, freqs, True)),
                               atol=1e-5, rtol=1e-5)

    # Case 3: include_input=False.
    fwd_ni, freqs_ni, out_dim_ni = make_harmonic_embedding(
        in_channels=C, n_harmonic_functions=H, include_input=False)
    y_ni = fwd_ni(x)
    jax.block_until_ready(y_ni)
    assert y_ni.shape == (B, S, out_dim_ni), (y_ni.shape, out_dim_ni)
    np.testing.assert_allclose(np.asarray(y_ni),
                               np.asarray(ref_forward(x, freqs_ni, False)),
                               atol=1e-5, rtol=1e-5)

    print("KERNEL_OK")
</pallas_src>

<mosaic_0001>
module attributes {stable_mosaic.version = 11 : i64} {
  func.func @_harmonic_kernel(%arg0: i32, %arg1: memref<16x3xf32, #tpu.memory_space<vmem>>, %arg2: memref<1x6xf32, #tpu.memory_space<vmem>>, %arg3: memref<16x39xf32, #tpu.memory_space<vmem>>) attributes {dimension_semantics = [#tpu.dimension_semantics<parallel>], iteration_bounds = array<i64: 1>, scalar_prefetch = 0 : i64, scratch_operands = 0 : i64, tpu.core_type = #tpu.core_type<tc>, window_params = [{transform_indices = @transform_0, window_bounds = array<i64: 16, 3>}, {pipeline_mode = #tpu.pipeline_mode<synchronous>, transform_indices = @transform_1, window_bounds = array<i64: 1, 6>}, {transform_indices = @transform_2, window_bounds = array<i64: 16, 39>}]} {
    %c0 = arith.constant 0 : index
    %c0_0 = arith.constant 0 : index
    %0 = vector.load %arg1[%c0, %c0_0] : memref<16x3xf32, #tpu.memory_space<vmem>>, vector<16x3xf32>
    %c0_1 = arith.constant 0 : index
    %c0_2 = arith.constant 0 : index
    %1 = vector.load %arg2[%c0_1, %c0_2] : memref<1x6xf32, #tpu.memory_space<vmem>>, vector<1x6xf32>
    %2 = vector.extract_strided_slice %0 {offsets = [0, 0], sizes = [16, 1], strides = [1, 1]} : vector<16x3xf32> to vector<16x1xf32>
    %3 = vector.broadcast %2 : vector<16x1xf32> to vector<16x6xf32>
    %4 = vector.broadcast %1 : vector<1x6xf32> to vector<16x6xf32>
    %5 = arith.mulf %3, %4 : vector<16x6xf32>
    %6 = vector.extract_strided_slice %0 {offsets = [0, 1], sizes = [16, 1], strides = [1, 1]} : vector<16x3xf32> to vector<16x1xf32>
    %7 = vector.broadcast %6 : vector<16x1xf32> to vector<16x6xf32>
    %8 = vector.broadcast %1 : vector<1x6xf32> to vector<16x6xf32>
    %9 = arith.mulf %7, %8 : vector<16x6xf32>
    %10 = vector.extract_strided_slice %0 {offsets = [0, 2], sizes = [16, 1], strides = [1, 1]} : vector<16x3xf32> to vector<16x1xf32>
    %11 = vector.broadcast %10 : vector<16x1xf32> to vector<16x6xf32>
    %12 = vector.broadcast %1 : vector<1x6xf32> to vector<16x6xf32>
    %13 = arith.mulf %11, %12 : vector<16x6xf32>
    %14 = tpu.concatenate %5, %9, %13 in 1 : vector<16x6xf32>, vector<16x6xf32>, vector<16x6xf32> -> vector<16x18xf32>
    %15 = math.sin %14 : vector<16x18xf32>
    %c0_3 = arith.constant 0 : index
    %c0_4 = arith.constant 0 : index
    %16 = vector.load %arg3[%c0_3, %c0_4] : memref<16x39xf32, #tpu.memory_space<vmem>>, vector<16x18xf32>
    tpu.vector_store %arg3[%c0_3, %c0_4], %15 {strides = array<i32>} : memref<16x39xf32, #tpu.memory_space<vmem>>, vector<16x18xf32>,
    %17 = math.cos %14 : vector<16x18xf32>
    %c0_5 = arith.constant 0 : index
    %c18 = arith.constant 18 : index
    %18 = vector.load %arg3[%c0_5, %c18] : memref<16x39xf32, #tpu.memory_space<vmem>>, vector<16x18xf32>
    tpu.vector_store %arg3[%c0_5, %c18], %17 {strides = array<i32>} : memref<16x39xf32, #tpu.memory_space<vmem>>, vector<16x18xf32>,
    %c0_6 = arith.constant 0 : index
    %c36 = arith.constant 36 : index
    %19 = vector.load %arg3[%c0_6, %c36] : memref<16x39xf32, #tpu.memory_space<vmem>>, vector<16x3xf32>
    tpu.vector_store %arg3[%c0_6, %c36], %0 {strides = array<i32>} : memref<16x39xf32, #tpu.memory_space<vmem>>, vector<16x3xf32>,
    return
  }
  func.func @transform_0(%arg0: i32) -> (i32, i32) {
    %c0_i32 = arith.constant 0 : i32
    %c0_i32_0 = arith.constant 0 : i32
    return %arg0, %c0_i32 : i32, i32
  }
  func.func @transform_1(%arg0: i32) -> (i32, i32) {
    %c0_i32 = arith.constant 0 : i32
    %c0_i32_0 = arith.constant 0 : i32
    %c0_i32_1 = arith.constant 0 : i32
    return %c0_i32, %c0_i32_0 : i32, i32
  }
  func.func @transform_2(%arg0: i32) -> (i32, i32) {
    %c0_i32 = arith.constant 0 : i32
    %c0_i32_0 = arith.constant 0 : i32
    return %arg0, %c0_i32 : i32, i32
  }
}

</mosaic_0001>

<llo_original>
// kernel: tpu_custom_call.1
$region0: #{tpu_custom_call.1}
  #allocation0 [shape = 'u32[]', space=smem, size = 0x4, offset = 0x4, fixed_abs, tag = 'smem constant byte address 0x4 - core index']
  #allocation1 [shape = 'u32[144,128]{1,0:T(1,128)}', space=vmem, size = 0x12000, scoped, tag = 'internal scratch']
  %s0 = inlined_call_operand.vmem [shape: f32[16,3], index: 0, kind: input, shape index: {}]
  %s1 = inlined_call_operand.vmem [shape: f32[1,6], index: 1, kind: input, shape index: {}]
  %s2 = inlined_call_operand.hbm [shape: f32[16,39], index: 2, kind: output, shape index: {}]
  %s3 = sld [smem:[#allocation0]]
  $region18: #{tpu_custom_call.1} parent=0
    _
  %s5 = ssub.s32 1, %s3
  %s6 = scalar_select 0, %s5, %s3
  $region1: #{tpu_custom_call.1} parent=0
    #allocation2 [shape = 'u8[8192]{0}', space=vmem, size = 0x2000, scoped, tag = 'output window, operand 0, single buffered']
    #allocation3 [shape = 's32[1]{0}', space=sflag, size = 0x4, scoped, tag = 'scoped memory for tpu_custom_call.1']
    %7 = vsyncpa [#allocation3], 0
    // Predicated region
    $region2: #{tpu_custom_call.1} parent=1 // pred_check
      _
    $region3: #{tpu_custom_call.1} parent=1 // pred_check_branch
      %9 = sbr.rel (0) target = $region5
    $region4: #{tpu_custom_call.1} parent=1 // pred_region
      _
    $region5: #{tpu_custom_call.1} parent=1 // pred_fallthru
      _
    // Predicated region
    $region6: #{tpu_custom_call.1} parent=1 // pred_check
      _
    $region7: #{tpu_custom_call.1} parent=1 // pred_check_branch
      %11 = sbr.rel (0) target = $region9
    $region8: #{tpu_custom_call.1} parent=1 // pred_region
      _
    $region9: #{tpu_custom_call.1} parent=1 // pred_fallthru
      _
    %v12 = vld [vmem:[%s0] sm:$0xff]
    %v13 = vld [vmem:[%s0 + $0x8] sm:$0xff]
    %v14 = vld [vmem:[%s1] sm:$0x1]
    %16 = vset.pattern.permute.xlu0 0
    %17 = vperm.xlu0 %16, %v12
    %v18 = vpop.permute.xlu0 %17
    %21 = vset.pattern.permute.xlu0 0
    %22 = vperm.xlu0 %21, %v13
    %v23 = vpop.permute.xlu0 %22
    %v26 = vlaneseq
    %v27 = vshrl.u32 %v26, 7
    %v28 = vsub.s32 0, %v27
    %v29 = vrot.slane %v14, %v28
    %v31 = vmul.f32 %v18, %v29
    %v32 = vmul.f32 %v23, %v29
    %33 = vset.pattern.permute.xlu0 1
    %34 = vperm.xlu0 %33, %v12
    %v35 = vpop.permute.xlu0 %34
    %37 = vset.pattern.permute.xlu0 1
    %38 = vperm.xlu0 %37, %v13
    %v39 = vpop.permute.xlu0 %38
    %v41 = vmul.f32 %v35, %v29
    %v42 = vmul.f32 %v39, %v29
    %43 = vset.pattern.permute.xlu0 2
    %44 = vperm.xlu0 %43, %v12
    %v45 = vpop.permute.xlu0 %44
    %47 = vset.pattern.permute.xlu0 2
    %48 = vperm.xlu0 %47, %v13
    %v49 = vpop.permute.xlu0 %48
    %v51 = vmul.f32 %v45, %v29
    %v52 = vmul.f32 %v49, %v29
    %55 = vrot.lane.b32.xlu0 %v41, 6
    %v56 = vpop.permute.xlu0 %55
    %57 = vrot.lane.b32.xlu0 %v42, 6
    %v58 = vpop.permute.xlu0 %57
    %63 = vrot.lane.b32.xlu0 %v51, 12
    %v64 = vpop.permute.xlu0 %63
    %65 = vrot.lane.b32.xlu0 %v52, 12
    %v66 = vpop.permute.xlu0 %65
    %vm69 = vcmask 48128
    %v70 = vsel %vm69, %v31, %v56
    %v71 = vsel %vm69, %v32, %v58
    %vm72 = vcmask 97280
    %v73 = vsel %vm72, %v70, %v64
    %v74 = vsel %vm72, %v71, %v66
    %v75 = vand.u32 2147483647, %v73
    %vm76 = vcmp.le.f32.partialorder %v75, 0.7853982
    %vm77 = vcmp.lt.s32.totalorder %v73, 0
    %v78 = vand.u32 %v73, 2139095040
    %v79 = vshrl.u32 %v78, 23
    %v80 = vsub.s32 %v79, 127
    %v81 = vand.u32 2147483647, %v73
    %v82 = vand.u32 %v81, 8388607
    %v83 = vor.u32 %v82, 8388608
    %v84 = vsub.s32 0, %v83
    %v85 = vadd.s32 %v80, 1
    %vm86 = vcmp.gt.s32.totalorder %v85, 0
    %v87 = vsel %vm86, %v85, 0
    %v88 = vshrl.u32 %v87, 5
    %v89 = vand.u32 %v87, 31
    %v90 = vsub.s32 32, %v89
    %v91 = vshrl.u32 683565275, %v90
    %v92 = vshll.u32 683565275, %v89
    %v93 = vshrl.u32 2475754826, %v90
    %v94 = vor.u32 %v92, %v93
    %v95 = vshll.u32 2475754826, %v89
    %v96 = vshrl.u32 2131351028, %v90
    %v97 = vor.u32 %v95, %v96
    %v98 = vshll.u32 2131351028, %v89
    %v99 = vshrl.u32 2102212464, %v90
    %v100 = vor.u32 %v98, %v99
    %v101 = vshll.u32 2102212464, %v89
    %v102 = vshrl.u32 920167782, %v90
    %v103 = vor.u32 %v101, %v102
    %v104 = vshll.u32 920167782, %v89
    %v105 = vshrl.u32 1326507024, %v90
    %v106 = vor.u32 %v104, %v105
    %vm107 = vcmp.lt.s32.totalorder %v88, 1
    %vm108 = vcmp.lt.s32.totalorder %v88, 2
    %vm109 = vcmp.lt.s32.totalorder %v88, 3
    %vm110 = vcmp.lt.s32.totalorder %v88, 4
    %v111 = vsel %vm107, %v91, %v94
    %v112 = vsel %vm110, %v100, 2102212464
    %v113 = vsel %vm109, %v97, %v112
    %v114 = vsel %vm108, %v111, %v113
    %v115 = vsel %vm107, %v94, %v97
    %v116 = vsel %vm110, %v103, 920167782
    %v117 = vsel %vm109, %v100, %v116
    %v118 = vsel %vm108, %v115, %v117
    %v119 = vsel %vm107, %v97, %v100
    %v120 = vsel %vm110, %v106, 1326507024
    %v121 = vsel %vm109, %v103, %v120
    %v122 = vsel %vm108, %v119, %v121
    %v123 = vshll.u32 %v83, 8
    %v124 = vmul.u32.u64.compose %v123, %v122
    %v125 = vextract.low.u32 %v124
    %v126 = vextract.high.u32 %v124
    %v127 = vmul.u32.u64.compose %v123, %v118
    %v128 = vextract.low.u32 %v127
    %v129 = vextract.high.u32 %v127
    %v130 = vmul.u32 %v123, %v114
    %v131 = vadd.s32 %v126, %v128
    %vm132 = vc.u32 %v126, %v128
    %v133 = vadd.s32 %v129, 1
    %v134 = vsel %vm132, %v133, %v129
    %v135 = vadd.s32 %v130, %v134
    %v136 = vadd.s32 %v135, 536870912
    %v137 = vshrl.u32 %v136, 30
    %v138 = vshll.u32 %v137, 30
    %v139 = vsub.s32 %v135, %v138
    %vm140 = vcmp.lt.s32.totalorder %v139, 0
    %v141 = vsub.s32 0, %v139
    %v142 = vsel %vm140, %v141, %v139
    %v143 = vclz %v142
    %v144 = vsub.s32 %v143, 2
    %vm145 = vcmp.gt.s32.totalorder 0, %v144
    %v146 = vsel %vm145, 0, %v144
    %v147 = vsub.s32 32, %v146
    %v148 = vshll.u32 %v139, %v146
    %v149 = vshrl.u32 %v131, %v147
    %v150 = vor.u32 %v148, %v149
    %v151 = vsub.s32 4294967266, %v146
    %v152 = vadd.s32 %v151, 127
    %v153 = vshll.u32 %v152, 23
    %v154 = vor.u32 4788187, %v153
    %v155 = vand.u32 2147483647, %v154
    %v157 = vcvt.s32.f32 %v150
    %v158 = vmul.f32 %v157, %v155
    %v159 = vxor.u32 %v158, 2147483648
    %v160 = vsel %vm77, %v159, %v158
    %v161 = vsub.s32 4, %v137
    %v162 = vsel %vm77, %v161, %v137
    %v163 = vsel %vm76, %v73, %v160
    %v164 = vsel %vm76, 0, %v162
    %v165 = vcosq.f32.pop %v163
    %v166 = vsinq.f32.pop %v163
    %vm167 = vweird.f32 %v73
    %v168 = vadd.s32 %v164, 3
    %v169 = vand.u32 %v168, 3
    %vm170 = vcmp.lt.s32.totalorder %v169, 2
    %vm171 = vcmp.eq.s32.totalorder %v169, 0
    %v172 = vxor.u32 %v166, 2147483648
    %v173 = vsel %vm171, %v165, %v172
    %vm174 = vcmp.eq.s32.totalorder %v169, 2
    %v175 = vxor.u32 %v165, 2147483648
    %v176 = vsel %vm174, %v175, %v166
    %v177 = vsel %vm170, %v173, %v176
    %v178 = vsel %vm167, nan, %v177
    %v179 = vand.u32 2147483647, %v74
    %vm180 = vcmp.le.f32.partialorder %v179, 0.7853982
    %vm181 = vcmp.lt.s32.totalorder %v74, 0
    %v182 = vand.u32 %v74, 2139095040
    %v183 = vshrl.u32 %v182, 23
    %v184 = vsub.s32 %v183, 127
    %v185 = vand.u32 2147483647, %v74
    %v186 = vand.u32 %v185, 8388607
    %v187 = vor.u32 %v186, 8388608
    %v188 = vsub.s32 0, %v187
    %v189 = vadd.s32 %v184, 1
    %vm190 = vcmp.gt.s32.totalorder %v189, 0
    %v191 = vsel %vm190, %v189, 0
    %v192 = vshrl.u32 %v191, 5
    %v193 = vand.u32 %v191, 31
    %v194 = vsub.s32 32, %v193
    %v195 = vshrl.u32 683565275, %v194
    %v196 = vshll.u32 683565275, %v193
    %v197 = vshrl.u32 2475754826, %v194
    %v198 = vor.u32 %v196, %v197
    %v199 = vshll.u32 2475754826, %v193
    %v200 = vshrl.u32 2131351028, %v194
    %v201 = vor.u32 %v199, %v200
    %v202 = vshll.u32 2131351028, %v193
    %v203 = vshrl.u32 2102212464, %v194
    %v204 = vor.u32 %v202, %v203
    %v205 = vshll.u32 2102212464, %v193
    %v206 = vshrl.u32 920167782, %v194
    %v207 = vor.u32 %v205, %v206
    %v208 = vshll.u32 920167782, %v193
    %v209 = vshrl.u32 1326507024, %v194
    %v210 = vor.u32 %v208, %v209
    %vm211 = vcmp.lt.s32.totalorder %v192, 1
    %vm212 = vcmp.lt.s32.totalorder %v192, 2
    %vm213 = vcmp.lt.s32.totalorder %v192, 3
    %vm214 = vcmp.lt.s32.totalorder %v192, 4
    %v215 = vsel %vm211, %v195, %v198
    %v216 = vsel %vm214, %v204, 2102212464
    %v217 = vsel %vm213, %v201, %v216
    %v218 = vsel %vm212, %v215, %v217
    %v219 = vsel %vm211, %v198, %v201
    %v220 = vsel %vm214, %v207, 920167782
    %v221 = vsel %vm213, %v204, %v220
    %v222 = vsel %vm212, %v219, %v221
    %v223 = vsel %vm211, %v201, %v204
    %v224 = vsel %vm214, %v210, 1326507024
    %v225 = vsel %vm213, %v207, %v224
    %v226 = vsel %vm212, %v223, %v225
    %v227 = vshll.u32 %v187, 8
    %v228 = vmul.u32.u64.compose %v227, %v226
    %v229 = vextract.low.u32 %v228
    %v230 = vextract.high.u32 %v228
    %v231 = vmul.u32.u64.compose %v227, %v222
    %v232 = vextract.low.u32 %v231
    %v233 = vextract.high.u32 %v231
    %v234 = vmul.u32 %v227, %v218
    %v235 = vadd.s32 %v230, %v232
    %vm236 = vc.u32 %v230, %v232
    %v237 = vadd.s32 %v233, 1
    %v238 = vsel %vm236, %v237, %v233
    %v239 = vadd.s32 %v234, %v238
    %v240 = vadd.s32 %v239, 536870912
    %v241 = vshrl.u32 %v240, 30
    %v242 = vshll.u32 %v241, 30
    %v243 = vsub.s32 %v239, %v242
    %vm244 = vcmp.lt.s32.totalorder %v243, 0
    %v245 = vsub.s32 0, %v243
    %v246 = vsel %vm244, %v245, %v243
    %v247 = vclz %v246
    %v248 = vsub.s32 %v247, 2
    %vm249 = vcmp.gt.s32.totalorder 0, %v248
    %v250 = vsel %vm249, 0, %v248
    %v251 = vsub.s32 32, %v250
    %v252 = vshll.u32 %v243, %v250
    %v253 = vshrl.u32 %v235, %v251
    %v254 = vor.u32 %v252, %v253
    %v255 = vsub.s32 4294967266, %v250
    %v256 = vadd.s32 %v255, 127
    %v257 = vshll.u32 %v256, 23
    %v258 = vor.u32 4788187, %v257
    %v259 = vand.u32 2147483647, %v258
    %v261 = vcvt.s32.f32 %v254
    %v262 = vmul.f32 %v261, %v259
    %v263 = vxor.u32 %v262, 2147483648
    %v264 = vsel %vm181, %v263, %v262
    %v265 = vsub.s32 4, %v241
    %v266 = vsel %vm181, %v265, %v241
    %v267 = vsel %vm180, %v74, %v264
    %v268 = vsel %vm180, 0, %v266
    %v269 = vcosq.f32.pop %v267
    %v270 = vsinq.f32.pop %v267
    %vm271 = vweird.f32 %v74
    %v272 = vadd.s32 %v268, 3
    %v273 = vand.u32 %v272, 3
    %vm274 = vcmp.lt.s32.totalorder %v273, 2
    %vm275 = vcmp.eq.s32.totalorder %v273, 0
    %v276 = vxor.u32 %v270, 2147483648
    %v277 = vsel %vm275, %v269, %v276
    %vm278 = vcmp.eq.s32.totalorder %v273, 2
    %v279 = vxor.u32 %v269, 2147483648
    %v280 = vsel %vm278, %v279, %v270
    %v281 = vsel %vm274, %v277, %v280
    %v282 = vsel %vm271, nan, %v281
    %vm283 = vcmask 146432
    %284 = vst.msk [vmem:[#allocation2] sm:$0xff] %vm283, %v178
    %285 = vst.msk [vmem:[#allocation2 + $0x8] sm:$0xff] %vm283, %v282
    %v286 = vand.u32 2147483647, %v73
    %vm287 = vcmp.le.f32.partialorder %v286, 0.7853982
    %vm288 = vcmp.lt.s32.totalorder %v73, 0
    %v289 = vand.u32 %v73, 2139095040
    %v290 = vshrl.u32 %v289, 23
    %v291 = vsub.s32 %v290, 127
    %v292 = vand.u32 2147483647, %v73
    %v293 = vand.u32 %v292, 8388607
    %v294 = vor.u32 %v293, 8388608
    %v295 = vsub.s32 0, %v294
    %v296 = vadd.s32 %v291, 1
    %vm297 = vcmp.gt.s32.totalorder %v296, 0
    %v298 = vsel %vm297, %v296, 0
    %v299 = vshrl.u32 %v298, 5
    %v300 = vand.u32 %v298, 31
    %v301 = vsub.s32 32, %v300
    %v302 = vshrl.u32 683565275, %v301
    %v303 = vshll.u32 683565275, %v300
    %v304 = vshrl.u32 2475754826, %v301
    %v305 = vor.u32 %v303, %v304
    %v306 = vshll.u32 2475754826, %v300
    %v307 = vshrl.u32 2131351028, %v301
    %v308 = vor.u32 %v306, %v307
    %v309 = vshll.u32 2131351028, %v300
    %v310 = vshrl.u32 2102212464, %v301
    %v311 = vor.u32 %v309, %v310
    %v312 = vshll.u32 2102212464, %v300
    %v313 = vshrl.u32 920167782, %v301
    %v314 = vor.u32 %v312, %v313
    %v315 = vshll.u32 920167782, %v300
    %v316 = vshrl.u32 1326507024, %v301
    %v317 = vor.u32 %v315, %v316
    %vm318 = vcmp.lt.s32.totalorder %v299, 1
    %vm319 = vcmp.lt.s32.totalorder %v299, 2
    %vm320 = vcmp.lt.s32.totalorder %v299, 3
    %vm321 = vcmp.lt.s32.totalorder %v299, 4
    %v322 = vsel %vm318, %v302, %v305
    %v323 = vsel %vm321, %v311, 2102212464
    %v324 = vsel %vm320, %v308, %v323
    %v325 = vsel %vm319, %v322, %v324
    %v326 = vsel %vm318, %v305, %v308
    %v327 = vsel %vm321, %v314, 920167782
    %v328 = vsel %vm320, %v311, %v327
    %v329 = vsel %vm319, %v326, %v328
    %v330 = vsel %vm318, %v308, %v311
    %v331 = vsel %vm321, %v317, 1326507024
    %v332 = vsel %vm320, %v314, %v331
    %v333 = vsel %vm319, %v330, %v332
    %v334 = vshll.u32 %v294, 8
    %v335 = vmul.u32.u64.compose %v334, %v333
    %v336 = vextract.low.u32 %v335
    %v337 = vextract.high.u32 %v335
    %v338 = vmul.u32.u64.compose %v334, %v329
    %v339 = vextract.low.u32 %v338
    %v340 = vextract.high.u32 %v338
    %v341 = vmul.u32 %v334, %v325
    %v342 = vadd.s32 %v337, %v339
    %vm343 = vc.u32 %v337, %v339
    %v344 = vadd.s32 %v340, 1
    %v345 = vsel %vm343, %v344, %v340
    %v346 = vadd.s32 %v341, %v345
    %v347 = vadd.s32 %v346, 536870912
    %v348 = vshrl.u32 %v347, 30
    %v349 = vshll.u32 %v348, 30
    %v350 = vsub.s32 %v346, %v349
    %vm351 = vcmp.lt.s32.totalorder %v350, 0
    %v352 = vsub.s32 0, %v350
    %v353 = vsel %vm351, %v352, %v350
    %v354 = vclz %v353
    %v355 = vsub.s32 %v354, 2
    %vm356 = vcmp.gt.s32.totalorder 0, %v355
    %v357 = vsel %vm356, 0, %v355
    %v358 = vsub.s32 32, %v357
    %v359 = vshll.u32 %v350, %v357
    %v360 = vshrl.u32 %v342, %v358
    %v361 = vor.u32 %v359, %v360
    %v362 = vsub.s32 4294967266, %v357
    %v363 = vadd.s32 %v362, 127
    %v364 = vshll.u32 %v363, 23
    %v365 = vor.u32 4788187, %v364
    %v366 = vand.u32 2147483647, %v365
    %v368 = vcvt.s32.f32 %v361
    %v369 = vmul.f32 %v368, %v366
    %v370 = vxor.u32 %v369, 2147483648
    %v371 = vsel %vm288, %v370, %v369
    %v372 = vsub.s32 4, %v348
    %v373 = vsel %vm288, %v372, %v348
    %v374 = vsel %vm287, %v73, %v371
    %v375 = vsel %vm287, 0, %v373
    %v376 = vcosq.f32.pop %v374
    %v377 = vsinq.f32.pop %v374
    %vm378 = vweird.f32 %v73
    %v379 = vand.u32 %v375, 3
    %vm380 = vcmp.lt.s32.totalorder %v379, 2
    %vm381 = vcmp.eq.s32.totalorder %v379, 0
    %v382 = vxor.u32 %v377, 2147483648
    %v383 = vsel %vm381, %v376, %v382
    %vm384 = vcmp.eq.s32.totalorder %v379, 2
    %v385 = vxor.u32 %v376, 2147483648
    %v386 = vsel %vm384, %v385, %v377
    %v387 = vsel %vm380, %v383, %v386
    %v388 = vsel %vm378, nan, %v387
    %v389 = vand.u32 2147483647, %v74
    %vm390 = vcmp.le.f32.partialorder %v389, 0.7853982
    %vm391 = vcmp.lt.s32.totalorder %v74, 0
    %v392 = vand.u32 %v74, 2139095040
    %v393 = vshrl.u32 %v392, 23
    %v394 = vsub.s32 %v393, 127
    %v395 = vand.u32 2147483647, %v74
    %v396 = vand.u32 %v395, 8388607
    %v397 = vor.u32 %v396, 8388608
    %v398 = vsub.s32 0, %v397
    %v399 = vadd.s32 %v394, 1
    %vm400 = vcmp.gt.s32.totalorder %v399, 0
    %v401 = vsel %vm400, %v399, 0
    %v402 = vshrl.u32 %v401, 5
    %v403 = vand.u32 %v401, 31
    %v404 = vsub.s32 32, %v403
    %v405 = vshrl.u32 683565275, %v404
    %v406 = vshll.u32 683565275, %v403
    %v407 = vshrl.u32 2475754826, %v404
    %v408 = vor.u32 %v406, %v407
    %v409 = vshll.u32 2475754826, %v403
    %v410 = vshrl.u32 2131351028, %v404
    %v411 = vor.u32 %v409, %v410
    %v412 = vshll.u32 2131351028, %v403
    %v413 = vshrl.u32 2102212464, %v404
    %v414 = vor.u32 %v412, %v413
    %v415 = vshll.u32 2102212464, %v403
    %v416 = vshrl.u32 920167782, %v404
    %v417 = vor.u32 %v415, %v416
    %v418 = vshll.u32 920167782, %v403
    %v419 = vshrl.u32 1326507024, %v404
    %v420 = vor.u32 %v418, %v419
    %vm421 = vcmp.lt.s32.totalorder %v402, 1
    %vm422 = vcmp.lt.s32.totalorder %v402, 2
    %vm423 = vcmp.lt.s32.totalorder %v402, 3
    %vm424 = vcmp.lt.s32.totalorder %v402, 4
    %v425 = vsel %vm421, %v405, %v408
    %v426 = vsel %vm424, %v414, 2102212464
    %v427 = vsel %vm423, %v411, %v426
    %v428 = vsel %vm422, %v425, %v427
    %v429 = vsel %vm421, %v408, %v411
    %v430 = vsel %vm424, %v417, 920167782
    %v431 = vsel %vm423, %v414, %v430
    %v432 = vsel %vm422, %v429, %v431
    %v433 = vsel %vm421, %v411, %v414
    %v434 = vsel %vm424, %v420, 1326507024
    %v435 = vsel %vm423, %v417, %v434
    %v436 = vsel %vm422, %v433, %v435
    %v437 = vshll.u32 %v397, 8
    %v438 = vmul.u32.u64.compose %v437, %v436
    %v439 = vextract.low.u32 %v438
    %v440 = vextract.high.u32 %v438
    %v441 = vmul.u32.u64.compose %v437, %v432
    %v442 = vextract.low.u32 %v441
    %v443 = vextract.high.u32 %v441
    %v444 = vmul.u32 %v437, %v428
    %v445 = vadd.s32 %v440, %v442
    %vm446 = vc.u32 %v440, %v442
    %v447 = vadd.s32 %v443, 1
    %v448 = vsel %vm446, %v447, %v443
    %v449 = vadd.s32 %v444, %v448
    %v450 = vadd.s32 %v449, 536870912
    %v451 = vshrl.u32 %v450, 30
    %v452 = vshll.u32 %v451, 30
    %v453 = vsub.s32 %v449, %v452
    %vm454 = vcmp.lt.s32.totalorder %v453, 0
    %v455 = vsub.s32 0, %v453
    %v456 = vsel %vm454, %v455, %v453
    %v457 = vclz %v456
    %v458 = vsub.s32 %v457, 2
    %vm459 = vcmp.gt.s32.totalorder 0, %v458
    %v460 = vsel %vm459, 0, %v458
    %v461 = vsub.s32 32, %v460
    %v462 = vshll.u32 %v453, %v460
    %v463 = vshrl.u32 %v445, %v461
    %v464 = vor.u32 %v462, %v463
    %v465 = vsub.s32 4294967266, %v460
    %v466 = vadd.s32 %v465, 127
    %v467 = vshll.u32 %v466, 23
    %v468 = vor.u32 4788187, %v467
    %v469 = vand.u32 2147483647, %v468
    %v471 = vcvt.s32.f32 %v464
    %v472 = vmul.f32 %v471, %v469
    %v473 = vxor.u32 %v472, 2147483648
    %v474 = vsel %vm391, %v473, %v472
    %v475 = vsub.s32 4, %v451
    %v476 = vsel %vm391, %v475, %v451
    %v477 = vsel %vm390, %v74, %v474
    %v478 = vsel %vm390, 0, %v476
    %v479 = vcosq.f32.pop %v477
    %v480 = vsinq.f32.pop %v477
    %vm481 = vweird.f32 %v74
    %v482 = vand.u32 %v478, 3
    %vm483 = vcmp.lt.s32.totalorder %v482, 2
    %vm484 = vcmp.eq.s32.totalorder %v482, 0
    %v485 = vxor.u32 %v480, 2147483648
    %v486 = vsel %vm484, %v479, %v485
    %vm487 = vcmp.eq.s32.totalorder %v482, 2
    %v488 = vxor.u32 %v479, 2147483648
    %v489 = vsel %vm487, %v488, %v480
    %v490 = vsel %vm483, %v486, %v489
    %v491 = vsel %vm481, nan, %v490
    %494 = vrot.lane.b32.xlu0 %v388, 18
    %v495 = vpop.permute.xlu0 %494
    %496 = vrot.lane.b32.xlu0 %v491, 18
    %v497 = vpop.permute.xlu0 %496
    %vm500 = vcmask 294032
    %501 = vst.msk [vmem:[#allocation2] sm:$0xff] %vm500, %v495
    %502 = vst.msk [vmem:[#allocation2 + $0x8] sm:$0xff] %vm500, %v497
    %503 = vrot.lane.b32.xlu0 %v12, 36
    %v504 = vpop.permute.xlu0 %503
    %505 = vrot.lane.b32.xlu0 %v13, 36
    %v506 = vpop.permute.xlu0 %505
    %vm509 = vcmask 318752
    %510 = vst.msk [vmem:[#allocation2] sm:$0xff] %vm509, %v504
    %511 = vst.msk [vmem:[#allocation2 + $0x8] sm:$0xff] %vm509, %v506
    // Predicated region
    $region10: #{tpu_custom_call.1} parent=1 // pred_check
      _
    $region11: #{tpu_custom_call.1} parent=1 // pred_check_branch
      %513 = sbr.rel (0) target = $region13
    $region12: #{tpu_custom_call.1} parent=1 // pred_region
      %s515 = ssub.s32 256, 256
      %516 = vsyncadd [#allocation3], %s515
      %s517 = sshll.u32 [#allocation2], 4
      %s518 = int_to_ptr.vmem [resolvable:$true] %s517
      %523 = dma.vmem_to_hbm [thread:$0]  %s518, 256, %s2, [#allocation3], 128, 128, 8
    $region13: #{tpu_custom_call.1} parent=1 // pred_fallthru
      _
    // Predicated region
    $region14: #{tpu_custom_call.1} parent=1 // pred_check
      _
    $region15: #{tpu_custom_call.1} parent=1 // pred_check_branch
      %525 = sbr.rel (0) target = $region17
    $region16: #{tpu_custom_call.1} parent=1 // pred_region
      %526 = dma.done [#allocation3], 256
    $region17: #{tpu_custom_call.1} parent=1 // pred_fallthru
      _
    %527 = vsyncpa [#allocation3], 1

</llo_original>
